<compile_context>
chip_gen: v7x
topology: tpu7x:2x2x1
jax: 0.10.0
libtpu: 0.0.40
codegen_flags: <defaults>
</compile_context>

<pallas_src>
import functools

import numpy as np
import jax
import jax.numpy as jnp
from jax.experimental import pallas as pl
from jax.experimental.pallas import tpu as pltpu


def _accumulate_tile(x_ref, tgt_ref, inv_delta_ref, iota_ref, o_ref, *,
                     row_base, n_rows, masked):
    """Accumulate sum_i (logsumexp(out_i) - out_i[target_i]) for one tile."""
    x = x_ref[...]
    # scale/shift in the input/params dtype (bf16 on v6e/v7x bf16 callers),
    # promote to f32 only for the numerically-sensitive logsumexp.
    out = (x * inv_delta_ref[...] + iota_ref[...]).astype(jnp.float32)

    tn, c = out.shape
    cols = jax.lax.broadcasted_iota(jnp.int32, (tn, c), 1)
    # select-reduce (no float one-hot matmul): picks output[i, target[i]]
    correct = jnp.sum(jnp.where(cols == tgt_ref[...], out, 0.0),
                      axis=-1, keepdims=True)                       # (TN, 1)

    # numerically-stable logsumexp per row
    m = jnp.max(out, axis=-1, keepdims=True)
    lse = m + jnp.log(jnp.sum(jnp.exp(out - m), axis=-1, keepdims=True))

    per_row = lse - correct                                         # (TN, 1)
    if masked:
        # only the tile straddling N pays for the iota/compare/select
        rows = row_base + jax.lax.broadcasted_iota(jnp.int32, (tn, 1), 0)
        per_row = jnp.where(rows < n_rows, per_row, 0.0)

    o_ref[...] += jnp.sum(per_row, keepdims=True)                   # (1, 1)


def _vs_loss_kernel(x_ref, tgt_ref, inv_delta_ref, iota_ref, o_ref, *,
                    n_rows, tn, has_remainder):
    # x_ref:         (TN, C) logits tile
    # tgt_ref:       (TN, 1) int32 class indices
    # inv_delta_ref: (1, C)  precomputed 1 / Delta (f32 or bf16)
    # iota_ref:      (1, C)  iota (f32 or bf16)
    # o_ref:         (1, 1)  f32 partial sum for this split (resident across t)
    s = pl.program_id(0)          # split (parallel) axis
    t = pl.program_id(1)          # tile  (reduction) axis

    @pl.when(t == 0)
    def _():
        o_ref[...] = jnp.zeros_like(o_ref)

    row_base = (s * pl.num_programs(1) + t) * tn
    is_live = row_base < n_rows   # clamped overshoot tiles skip ALL compute

    acc = functools.partial(_accumulate_tile, x_ref, tgt_ref, inv_delta_ref,
                            iota_ref, o_ref, row_base=row_base, n_rows=n_rows)

    if has_remainder:
        @pl.when(jnp.logical_and(is_live, row_base + tn <= n_rows))
        def _():
            acc(masked=False)          # interior full tile: no mask ops

        @pl.when(jnp.logical_and(is_live, row_base + tn > n_rows))
        def _():
            acc(masked=True)           # the one tile straddling N
    else:
        @pl.when(is_live)
        def _():
            acc(masked=False)


def _chip_info():
    """Return (vmem_capacity_bytes per TensorCore, num TensorCores, kind str)."""
    vmem_cap = 128 << 20
    try:
        vmem_cap = int(pltpu.get_tpu_info().vmem_capacity_bytes)
    except Exception:
        pass
    kind = ""
    try:
        kind = jax.devices()[0].device_kind.lower()
    except Exception:
        pass
    # v7x: 2 TensorCores per chip and only 64 MiB VMEM per TC.
    num_tc = 2 if ("v7" in kind or vmem_cap <= (64 << 20)) else 1
    return vmem_cap, num_tc, kind


def vs_loss(x, target, delta_list, iota_list, *, tile_rows=None,
            force_splits=None, target_tile_bytes=2 << 20):
    """x: (N, C) float, target: (N,) int, delta/iota: (C,) -> scalar mean CE loss."""
    n, c = x.shape
    itemsize = jnp.dtype(x.dtype).itemsize

    vmem_cap, num_tc, kind = _chip_info()
    bf16_vpu = ("v6" in kind) or ("v7" in kind)

    # ---- tile sizing from bytes (DMA amortization) and VMEM budget -----------
    row_bytes = c * itemsize
    # working set per row: 2 double-buffered x rows + 2 target rows
    # + ~3 f32 intermediate rows (out / exp temp / select temps)
    per_row_vmem = 2 * row_bytes + 3 * c * 4 + 2 * 4
    tn_vmem = max(int(0.35 * vmem_cap) // max(per_row_vmem, 1), 8)
    tn_dma = max(target_tile_bytes // max(row_bytes, 1), 8)

    if tile_rows is not None:
        tn = int(tile_rows)
    else:
        tn = min(tn_dma, tn_vmem)
    tn = min(tn, n)
    if tn < n:
        tn = max(8, (tn // 8) * 8)   # sublane-dim blocks: multiples of 8
    else:
        tn = n                       # full-array block: any size allowed

    num_blocks = pl.cdiv(n, tn)

    # ---- split across TensorCores only where it helps -------------------------
    if force_splits is not None:
        num_splits = max(1, min(int(force_splits), num_blocks))
    else:
        num_splits = num_tc if (num_tc > 1 and num_blocks >= 4 * num_tc) else 1
    tiles_per_split = pl.cdiv(num_blocks, num_splits)
    has_remainder = (n % tn) != 0

    tgt = target.reshape(n, 1).astype(jnp.int32)
    # hoist the divide: precompute 1/Delta; keep params in bf16 only when the
    # chip has a bf16 VPU (v6e/v7x) AND the logits are bf16, else f32.
    param_dtype = jnp.bfloat16 if (bf16_vpu and x.dtype == jnp.bfloat16) else jnp.float32
    inv_delta = (1.0 / delta_list.astype(jnp.float32)).astype(param_dtype).reshape(1, c)
    iota = iota_list.astype(jnp.float32).astype(param_dtype).reshape(1, c)

    def row_block(s, t):
        # clamp overshoot tiles of the last split into range; compute is skipped
        return (jnp.minimum(s * tiles_per_split + t, num_blocks - 1), 0)

    kernel = functools.partial(_vs_loss_kernel, n_rows=n, tn=tn,
                               has_remainder=has_remainder)

    cost = pl.CostEstimate(
        flops=6 * n * c,
        transcendentals=n * c + n,
        bytes_accessed=n * c * itemsize + n * 4 + 2 * c * 4 + num_splits * 4,
    )

    # VMEM budget: double-buffered x/target tiles + f32 intermediates + residents,
    # capped at 75% of the per-core VMEM for this generation.
    vmem_need = (2 * (tn * c * itemsize + tn * 4)
                 + 3 * tn * c * 4
                 + 2 * c * 4 + num_splits * 4)
    vmem_limit = int(min(max(2 * vmem_need, 16 << 20), (3 * vmem_cap) // 4))

    partials = pl.pallas_call(
        kernel,
        out_shape=jax.ShapeDtypeStruct((num_splits, 1), jnp.float32),
        grid_spec=pltpu.PrefetchScalarGridSpec(
            num_scalar_prefetch=0,
            grid=(num_splits, tiles_per_split),
            in_specs=[
                pl.BlockSpec((tn, c), row_block),           # x tile
                pl.BlockSpec((tn, 1), row_block),           # target tile
                pl.BlockSpec((1, c), lambda s, t: (0, 0)),  # 1/Delta (resident)
                pl.BlockSpec((1, c), lambda s, t: (0, 0)),  # iota (resident)
            ],
            out_specs=pl.BlockSpec((1, 1), lambda s, t: (s, 0)),
        ),
        compiler_params=pltpu.CompilerParams(
            dimension_semantics=("parallel", "arbitrary"),
            vmem_limit_bytes=vmem_limit,
        ),
        cost_estimate=cost,
    )(x, tgt, inv_delta, iota)

    # sum of per-split partial sums divided by the true N (not a mean of means)
    return jnp.sum(partials) / n


def make_vs_params(cls_num_list, gamma=0.2, tau=1.2):
    """Deterministic parameter construction, mirroring VSLoss.__init__."""
    cls_num_list = np.asarray(cls_num_list, dtype=np.float64)
    cls_probs = cls_num_list / cls_num_list.sum()
    temp = (1.0 / cls_num_list) ** gamma
    temp = temp / np.min(temp)
    iota_list = tau * np.log(cls_probs)
    delta_list = temp
    return (jnp.asarray(delta_list, dtype=jnp.float32),
            jnp.asarray(iota_list, dtype=jnp.float32))


if __name__ == "__main__":
    # Small deterministic example: 70 samples, 10 classes.
    cls_num_list = [100, 50, 30, 20, 10, 8, 6, 4, 2, 1]
    delta_list, iota_list = make_vs_params(cls_num_list, gamma=0.2, tau=1.2)

    key = jax.random.PRNGKey(0)
    kx, kt = jax.random.split(key)
    n, c = 70, len(cls_num_list)
    x = jax.random.normal(kx, (n, c), dtype=jnp.float32)
    target = jax.random.randint(kt, (n,), 0, c, dtype=jnp.int32)

    # plain-JAX reference of the same math
    out_ref = x / delta_list[None, :] + iota_list[None, :]
    lse = jax.scipy.special.logsumexp(out_ref, axis=-1)
    ref = jnp.mean(lse - out_ref[jnp.arange(n), target])

    # 1) auto-tuned configuration (single full-array tile at this small shape)
    loss = vs_loss(x, target, delta_list, iota_list)
    jax.block_until_ready(loss)
    assert jnp.allclose(loss, ref, rtol=1e-5, atol=1e-5), (loss, ref)

    # 2) forced small tiles + 2 splits: exercises multi-tile accumulation, the
    #    remainder mask on the straddling tile, and the overshoot-skip guard.
    loss2 = vs_loss(x, target, delta_list, iota_list, tile_rows=32, force_splits=2)
    jax.block_until_ready(loss2)
    assert jnp.allclose(loss2, ref, rtol=1e-5, atol=1e-5), (loss2, ref)

    print("KERNEL_OK")
</pallas_src>

<mosaic_0001>
module attributes {stable_mosaic.version = 11 : i64} {
  func.func @_vs_loss_kernel(%arg0: i32, %arg1: i32, %arg2: memref<70x10xf32, #tpu.memory_space<vmem>>, %arg3: memref<70x1xi32, #tpu.memory_space<vmem>>, %arg4: memref<1x10xf32, #tpu.memory_space<vmem>>, %arg5: memref<1x10xf32, #tpu.memory_space<vmem>>, %arg6: memref<1x1xf32, #tpu.memory_space<vmem>>) attributes {dimension_semantics = [#tpu.dimension_semantics<parallel>, #tpu.dimension_semantics<arbitrary>], iteration_bounds = array<i64: 1, 1>, scalar_prefetch = 0 : i64, scratch_operands = 0 : i64, tpu.core_type = #tpu.core_type<tc>, window_params = [{transform_indices = @transform_0, window_bounds = array<i64: 70, 10>}, {transform_indices = @transform_1, window_bounds = array<i64: 70, 1>}, {pipeline_mode = #tpu.pipeline_mode<synchronous>, transform_indices = @transform_2, window_bounds = array<i64: 1, 10>}, {pipeline_mode = #tpu.pipeline_mode<synchronous>, transform_indices = @transform_3, window_bounds = array<i64: 1, 10>}, {transform_indices = @transform_4, window_bounds = array<i64: 1, 1>}]} {
    %c0_i32 = arith.constant 0 : i32
    %0 = arith.cmpi eq, %arg1, %c0_i32 : i32
    %1 = arith.extui %0 : i1 to i32
    %c0_i32_0 = arith.constant 0 : i32
    %2 = arith.cmpi ne, %1, %c0_i32_0 : i32
    scf.if %2 {
      %cst = arith.constant 0.000000e+00 : f32
      %9 = vector.broadcast %cst : f32 to vector<1x1xf32>
      %c0 = arith.constant 0 : index
      %c0_3 = arith.constant 0 : index
      %10 = vector.load %arg6[%c0, %c0_3] : memref<1x1xf32, #tpu.memory_space<vmem>>, vector<1x1xf32>
      tpu.vector_store %arg6[%c0, %c0_3], %9 {strides = array<i32>} : memref<1x1xf32, #tpu.memory_space<vmem>>, vector<1x1xf32>,
    } else {
    }
    %c1_i32 = arith.constant 1 : i32
    %3 = arith.muli %arg0, %c1_i32 : i32
    %4 = arith.addi %3, %arg1 : i32
    %c70_i32 = arith.constant 70 : i32
    %5 = arith.muli %4, %c70_i32 : i32
    %c70_i32_1 = arith.constant 70 : i32
    %6 = arith.cmpi slt, %5, %c70_i32_1 : i32
    %7 = arith.extui %6 : i1 to i32
    %c0_i32_2 = arith.constant 0 : i32
    %8 = arith.cmpi ne, %7, %c0_i32_2 : i32
    scf.if %8 {
      %c0 = arith.constant 0 : index
      %c0_3 = arith.constant 0 : index
      %9 = vector.load %arg2[%c0, %c0_3] : memref<70x10xf32, #tpu.memory_space<vmem>>, vector<70x10xf32>
      %c0_4 = arith.constant 0 : index
      %c0_5 = arith.constant 0 : index
      %10 = vector.load %arg4[%c0_4, %c0_5] : memref<1x10xf32, #tpu.memory_space<vmem>>, vector<1x10xf32>
      %11 = vector.broadcast %10 : vector<1x10xf32> to vector<70x10xf32>
      %12 = arith.mulf %9, %11 : vector<70x10xf32>
      %c0_6 = arith.constant 0 : index
      %c0_7 = arith.constant 0 : index
      %13 = vector.load %arg5[%c0_6, %c0_7] : memref<1x10xf32, #tpu.memory_space<vmem>>, vector<1x10xf32>
      %14 = vector.broadcast %13 : vector<1x10xf32> to vector<70x10xf32>
      %15 = arith.addf %12, %14 : vector<70x10xf32>
      %16 = tpu.iota {dimensions = array<i32: 1>} : vector<70x10xi32>
      %c0_8 = arith.constant 0 : index
      %c0_9 = arith.constant 0 : index
      %17 = vector.load %arg3[%c0_8, %c0_9] : memref<70x1xi32, #tpu.memory_space<vmem>>, vector<70x1xi32>
      %18 = vector.broadcast %17 : vector<70x1xi32> to vector<70x10xi32>
      %19 = arith.cmpi eq, %16, %18 : vector<70x10xi32>
      %cst = arith.constant 0.000000e+00 : f32
      %20 = vector.broadcast %cst : f32 to vector<70x10xf32>
      %21 = arith.select %19, %15, %20 : vector<70x10xi1>, vector<70x10xf32>
      %cst_10 = arith.constant dense<0.000000e+00> : vector<70xf32>
      %22 = vector.multi_reduction <add>, %21, %cst_10 [1] : vector<70x10xf32> to vector<70xf32>
      %23 = vector.shape_cast %22 : vector<70xf32> to vector<70x1xf32>
      %cst_11 = arith.constant dense<0xFF800000> : vector<70xf32>
      %24 = vector.multi_reduction <maximumf>, %15, %cst_11 [1] : vector<70x10xf32> to vector<70xf32>
      %25 = vector.shape_cast %24 : vector<70xf32> to vector<70x1xf32>
      %26 = vector.broadcast %25 : vector<70x1xf32> to vector<70x10xf32>
      %27 = arith.subf %15, %26 : vector<70x10xf32>
      %28 = math.exp %27 : vector<70x10xf32>
      %cst_12 = arith.constant dense<0.000000e+00> : vector<70xf32>
      %29 = vector.multi_reduction <add>, %28, %cst_12 [1] : vector<70x10xf32> to vector<70xf32>
      %30 = vector.shape_cast %29 : vector<70xf32> to vector<70x1xf32>
      %31 = math.log %30 : vector<70x1xf32>
      %32 = arith.addf %25, %31 : vector<70x1xf32>
      %33 = arith.subf %32, %23 : vector<70x1xf32>
      %c0_13 = arith.constant 0 : index
      %c0_14 = arith.constant 0 : index
      %34 = vector.load %arg6[%c0_13, %c0_14] : memref<1x1xf32, #tpu.memory_space<vmem>>, vector<1x1xf32>
      %35 = vector.shape_cast %33 : vector<70x1xf32> to vector<1x70x1xf32>
      %cst_15 = arith.constant dense<0.000000e+00> : vector<1xf32>
      %36 = vector.multi_reduction <add>, %35, %cst_15 [1, 2] : vector<1x70x1xf32> to vector<1xf32>
      %37 = vector.shape_cast %36 : vector<1xf32> to vector<1x1x1xf32>
      %38 = vector.extract %37[0, 0, 0] : f32 from vector<1x1x1xf32>
      %39 = vector.broadcast %38 : f32 to vector<1x1xf32>
      %40 = arith.addf %34, %39 : vector<1x1xf32>
      %c0_16 = arith.constant 0 : index
      %c0_17 = arith.constant 0 : index
      %41 = vector.load %arg6[%c0_16, %c0_17] : memref<1x1xf32, #tpu.memory_space<vmem>>, vector<1x1xf32>
      tpu.vector_store %arg6[%c0_16, %c0_17], %40 {strides = array<i32>} : memref<1x1xf32, #tpu.memory_space<vmem>>, vector<1x1xf32>,
    } else {
    }
    return
  }
  func.func @transform_0(%arg0: i32, %arg1: i32) -> (i32, i32) {
    %c1_i32 = arith.constant 1 : i32
    %0 = arith.muli %arg0, %c1_i32 : i32
    %1 = arith.addi %0, %arg1 : i32
    %c0_i32 = arith.constant 0 : i32
    %2 = arith.minsi %1, %c0_i32 : i32
    %c0_i32_0 = arith.constant 0 : i32
    %c0_i32_1 = arith.constant 0 : i32
    return %2, %c0_i32_0 : i32, i32
  }
  func.func @transform_1(%arg0: i32, %arg1: i32) -> (i32, i32) {
    %c1_i32 = arith.constant 1 : i32
    %0 = arith.muli %arg0, %c1_i32 : i32
    %1 = arith.addi %0, %arg1 : i32
    %c0_i32 = arith.constant 0 : i32
    %2 = arith.minsi %1, %c0_i32 : i32
    %c0_i32_0 = arith.constant 0 : i32
    %c0_i32_1 = arith.constant 0 : i32
    return %2, %c0_i32_0 : i32, i32
  }
  func.func @transform_2(%arg0: i32, %arg1: i32) -> (i32, i32) {
    %c0_i32 = arith.constant 0 : i32
    %c0_i32_0 = arith.constant 0 : i32
    %c0_i32_1 = arith.constant 0 : i32
    return %c0_i32, %c0_i32_0 : i32, i32
  }
  func.func @transform_3(%arg0: i32, %arg1: i32) -> (i32, i32) {
    %c0_i32 = arith.constant 0 : i32
    %c0_i32_0 = arith.constant 0 : i32
    %c0_i32_1 = arith.constant 0 : i32
    return %c0_i32, %c0_i32_0 : i32, i32
  }
  func.func @transform_4(%arg0: i32, %arg1: i32) -> (i32, i32) {
    %c0_i32 = arith.constant 0 : i32
    %c0_i32_0 = arith.constant 0 : i32
    return %arg0, %c0_i32 : i32, i32
  }
}

</mosaic_0001>

<llo_original>
// kernel: tpu_custom_call.1
$region0: #{tpu_custom_call.1}
  #allocation0 [shape = 'u32[]', space=smem, size = 0x4, offset = 0x4, fixed_abs, tag = 'smem constant byte address 0x4 - core index']
  #allocation1 [shape = 'u32[144,128]{1,0:T(1,128)}', space=vmem, size = 0x12000, scoped, tag = 'internal scratch']
  %s0 = inlined_call_operand.vmem [shape: f32[70,10], index: 0, kind: input, shape index: {}]
  %s1 = inlined_call_operand.vmem [shape: s32[70,1], index: 1, kind: input, shape index: {}]
  %s2 = inlined_call_operand.vmem [shape: f32[1,10], index: 2, kind: input, shape index: {}]
  %s3 = inlined_call_operand.vmem [shape: f32[1,10], index: 3, kind: input, shape index: {}]
  %s4 = inlined_call_operand.hbm [shape: f32[1,1], index: 4, kind: output, shape index: {}]
  %s5 = sld [smem:[#allocation0]]
  $region34: #{tpu_custom_call.1} parent=0
    _
  %s7 = ssub.s32 1, %s5
  %s8 = scalar_select 0, %s7, %s5
  $region1: #{tpu_custom_call.1} parent=0
    #allocation2 [shape = 'u8[512]{0}', space=vmem, size = 0x400, scoped, tag = 'output window, operand 0, single buffered']
    #allocation3 [shape = 's32[1]{0}', space=sflag, size = 0x4, scoped, tag = 'scoped memory for tpu_custom_call.1']
    %9 = vsyncpa [#allocation3], 0
    // Predicated region
    $region2: #{tpu_custom_call.1} parent=1 // pred_check
      _
    $region3: #{tpu_custom_call.1} parent=1 // pred_check_branch
      %11 = sbr.rel (0) target = $region5
    $region4: #{tpu_custom_call.1} parent=1 // pred_region
      %s12 = sadd.s32 0, 0
      %p13 = scmp.lt.s32.totalorder %s12, 0
      %s14 = scalar_select %p13, %s12, 0
      %s15 = smul.u32 9, %s14
      %p16 = scmp.lt.s32.totalorder %s15, 8
      %s17 = scalar_select %p16, %s15, 8
      %s18 = smul.addr %s17, 8
      %s19 = scalar_lea.vmem %s0, %s18
      %s20 = sadd.s32 0, 0
      %p21 = scmp.lt.s32.totalorder %s20, 0
      %s22 = scalar_select %p21, %s20, 0
      %s23 = smul.u32 9, %s22
    $region5: #{tpu_custom_call.1} parent=1 // pred_fallthru
      _
    // Predicated region
    $region6: #{tpu_custom_call.1} parent=1 // pred_check
      _
    $region7: #{tpu_custom_call.1} parent=1 // pred_check_branch
      %25 = sbr.rel (0) target = $region9
    $region8: #{tpu_custom_call.1} parent=1 // pred_region
      %s26 = sadd.s32 0, 0
      %p27 = scmp.lt.s32.totalorder %s26, 0
      %s28 = scalar_select %p27, %s26, 0
      %s29 = smul.u32 9, %s28
      %p30 = scmp.lt.s32.totalorder %s29, 8
      %s31 = scalar_select %p30, %s29, 8
      %s32 = smul.addr %s31, 8
      %s33 = scalar_lea.vmem %s1, %s32
      %s34 = sadd.s32 0, 0
      %p35 = scmp.lt.s32.totalorder %s34, 0
      %s36 = scalar_select %p35, %s34, 0
      %s37 = smul.u32 9, %s36
    $region9: #{tpu_custom_call.1} parent=1 // pred_fallthru
      _
    // Predicated region
    $region10: #{tpu_custom_call.1} parent=1 // pred_check
      _
    $region11: #{tpu_custom_call.1} parent=1 // pred_check_branch
      %39 = sbr.rel (0) target = $region13
    $region12: #{tpu_custom_call.1} parent=1 // pred_region
      _
    $region13: #{tpu_custom_call.1} parent=1 // pred_fallthru
      _
    // Predicated region
    $region14: #{tpu_custom_call.1} parent=1 // pred_check
      _
    $region15: #{tpu_custom_call.1} parent=1 // pred_check_branch
      %41 = sbr.rel (0) target = $region17
    $region16: #{tpu_custom_call.1} parent=1 // pred_region
      _
    $region17: #{tpu_custom_call.1} parent=1 // pred_fallthru
      _
    %s42 = sadd.s32 0, 0
    %p43 = scmp.lt.s32.totalorder %s42, 0
    %s44 = scalar_select %p43, %s42, 0
    %s45 = smul.u32 9, %s44
    %p46 = scmp.lt.s32.totalorder %s45, 8
    %s47 = scalar_select %p46, %s45, 8
    %s48 = smul.addr %s47, 8
    %s49 = scalar_lea.vmem %s0, %s48
    %s50 = sadd.s32 0, 0
    %p51 = scmp.lt.s32.totalorder %s50, 0
    %s52 = scalar_select %p51, %s50, 0
    %s53 = smul.u32 9, %s52
    %p54 = scmp.lt.s32.totalorder %s53, 8
    %s55 = scalar_select %p54, %s53, 8
    %s56 = smul.addr %s55, 8
    %s57 = scalar_lea.vmem %s1, %s56
    %s58 = sadd.s32 0, 0
    %p59 = scmp.lt.s32.totalorder %s58, 0
    %s60 = scalar_select %p59, %s58, 0
    %s61 = smul.u32 9, %s60
    %p62 = scmp.lt.s32.totalorder %s61, 8
    %s63 = scalar_select %p62, %s61, 8
    %s64 = smul.addr %s63, 8
    %s65 = scalar_lea.vmem %s0, %s64
    %s66 = sadd.s32 0, 0
    %p67 = scmp.lt.s32.totalorder %s66, 0
    %s68 = scalar_select %p67, %s66, 0
    %s69 = smul.u32 9, %s68
    %s70 = sadd.s32 0, 0
    %p71 = scmp.lt.s32.totalorder %s70, 0
    %s72 = scalar_select %p71, %s70, 0
    %s73 = smul.u32 9, %s72
    %p74 = scmp.lt.s32.totalorder %s73, 8
    %s75 = scalar_select %p74, %s73, 8
    %s76 = smul.addr %s75, 8
    %s77 = scalar_lea.vmem %s1, %s76
    %s78 = sadd.s32 0, 0
    %p79 = scmp.lt.s32.totalorder %s78, 0
    %s80 = scalar_select %p79, %s78, 0
    %s81 = smul.u32 9, %s80
    %p82 = scmp.eq.s32.totalorder 0, 0
    // Predicated region
    $region18: #{tpu_custom_call.1} parent=1 // pred_check
      %p83 = pneg %p82
    $region19: #{tpu_custom_call.1} parent=1 // pred_check_branch
      %85 = sbr.rel (%p83) target = $region21
    $region20: #{tpu_custom_call.1} parent=1 // pred_region
      %vm86 = vcmask 0
      %87 = vst.msk [vmem:[#allocation2] sm:$0x1] %vm86, 0.0
    $region21: #{tpu_custom_call.1} parent=1 // pred_fallthru
      _
    %s88 = sadd.s32 0, 0
    %s89 = smul.u32 %s88, 70
    %p90 = scmp.lt.s32.totalorder %s89, 70
    // Predicated region
    $region22: #{tpu_custom_call.1} parent=1 // pred_check
      %p91 = pneg %p90
    $region23: #{tpu_custom_call.1} parent=1 // pred_check_branch
      %93 = sbr.rel (%p91) target = $region25
    $region24: #{tpu_custom_call.1} parent=1 // pred_region
      %v94 = vld [vmem:[%s65] sm:$0xff]
      %v95 = vld [vmem:[%s65 + $0x8] sm:$0xff]
      %v96 = vld [vmem:[%s65 + $0x10] sm:$0xff]
      %v97 = vld [vmem:[%s65 + $0x18] sm:$0xff]
      %v98 = vld [vmem:[%s65 + $0x20] sm:$0xff]
      %v99 = vld [vmem:[%s65 + $0x28] sm:$0xff]
      %v100 = vld [vmem:[%s65 + $0x30] sm:$0xff]
      %v101 = vld [vmem:[%s65 + $0x38] sm:$0xff]
      %v102 = vld [vmem:[%s65 + $0x40] sm:$0x3f]
      %v103 = vld [vmem:[%s2] sm:$0x1]
      %v105 = vlaneseq
      %v106 = vshrl.u32 %v105, 7
      %v107 = vsub.s32 0, %v106
      %v108 = vrot.slane %v103, %v107
      %v110 = vmul.f32 %v94, %v108
      %v111 = vmul.f32 %v95, %v108
      %v112 = vmul.f32 %v96, %v108
      %v113 = vmul.f32 %v97, %v108
      %v114 = vmul.f32 %v98, %v108
      %v115 = vmul.f32 %v99, %v108
      %v116 = vmul.f32 %v100, %v108
      %v117 = vmul.f32 %v101, %v108
      %v118 = vmul.f32 %v102, %v108
      %v119 = vld [vmem:[%s3] sm:$0x1]
      %v121 = vlaneseq
      %v122 = vshrl.u32 %v121, 7
      %v123 = vsub.s32 0, %v122
      %v124 = vrot.slane %v119, %v123
      %v126 = vadd.f32 %v110, %v124
      %v127 = vadd.f32 %v111, %v124
      %v128 = vadd.f32 %v112, %v124
      %v129 = vadd.f32 %v113, %v124
      %v130 = vadd.f32 %v114, %v124
      %v131 = vadd.f32 %v115, %v124
      %v132 = vadd.f32 %v116, %v124
      %v133 = vadd.f32 %v117, %v124
      %v134 = vadd.f32 %v118, %v124
      %v135 = vlaneseq
      %v136 = vand.u32 %v135, 127
      %v137 = vld [vmem:[%s77] sm:$0xff]
      %v138 = vld [vmem:[%s77 + $0x8] sm:$0xff]
      %v139 = vld [vmem:[%s77 + $0x10] sm:$0xff]
      %v140 = vld [vmem:[%s77 + $0x18] sm:$0xff]
      %v141 = vld [vmem:[%s77 + $0x20] sm:$0xff]
      %v142 = vld [vmem:[%s77 + $0x28] sm:$0xff]
      %v143 = vld [vmem:[%s77 + $0x30] sm:$0xff]
      %v144 = vld [vmem:[%s77 + $0x38] sm:$0xff]
      %v145 = vld [vmem:[%s77 + $0x40] sm:$0x3f]
      %146 = vset.pattern.permute.xlu0 0
      %147 = vperm.xlu0 %146, %v137
      %v148 = vpop.permute.xlu0 %147
      %149 = vset.pattern.permute.xlu0 0
      %150 = vperm.xlu0 %149, %v138
      %v151 = vpop.permute.xlu0 %150
      %152 = vset.pattern.permute.xlu0 0
      %153 = vperm.xlu0 %152, %v139
      %v154 = vpop.permute.xlu0 %153
      %155 = vset.pattern.permute.xlu0 0
      %156 = vperm.xlu0 %155, %v140
      %v157 = vpop.permute.xlu0 %156
      %158 = vset.pattern.permute.xlu0 0
      %159 = vperm.xlu0 %158, %v141
      %v160 = vpop.permute.xlu0 %159
      %161 = vset.pattern.permute.xlu0 0
      %162 = vperm.xlu0 %161, %v142
      %v163 = vpop.permute.xlu0 %162
      %164 = vset.pattern.permute.xlu0 0
      %165 = vperm.xlu0 %164, %v143
      %v166 = vpop.permute.xlu0 %165
      %167 = vset.pattern.permute.xlu0 0
      %168 = vperm.xlu0 %167, %v144
      %v169 = vpop.permute.xlu0 %168
      %170 = vset.pattern.permute.xlu0 0
      %171 = vperm.xlu0 %170, %v145
      %v172 = vpop.permute.xlu0 %171
      %vm173 = vcmp.eq.s32.totalorder %v136, %v148
      %vm174 = vcmp.eq.s32.totalorder %v136, %v151
      %vm175 = vcmp.eq.s32.totalorder %v136, %v154
      %vm176 = vcmp.eq.s32.totalorder %v136, %v157
      %vm177 = vcmp.eq.s32.totalorder %v136, %v160
      %vm178 = vcmp.eq.s32.totalorder %v136, %v163
      %vm179 = vcmp.eq.s32.totalorder %v136, %v166
      %vm180 = vcmp.eq.s32.totalorder %v136, %v169
      %vm181 = vcmp.eq.s32.totalorder %v136, %v172
      %v182 = vsel %vm173, %v126, 0.0
      %v183 = vsel %vm174, %v127, 0.0
      %v184 = vsel %vm175, %v128, 0.0
      %v185 = vsel %vm176, %v129, 0.0
      %v186 = vsel %vm177, %v130, 0.0
      %v187 = vsel %vm178, %v131, 0.0
      %v188 = vsel %vm179, %v132, 0.0
      %v189 = vsel %vm180, %v133, 0.0
      %v190 = vsel %vm181, %v134, 0.0
      %vm191 = vcmask 80896
      %v192 = vsel %vm191, %v182, 0.0
      %193 = vadd.xlane.f32.xlu0 %v192
      %v194 = vpop.xlane.xlu0 %193
      %v195 = vsel %vm191, %v183, 0.0
      %196 = vadd.xlane.f32.xlu0 %v195
      %v197 = vpop.xlane.xlu0 %196
      %v198 = vsel %vm191, %v184, 0.0
      %199 = vadd.xlane.f32.xlu0 %v198
      %v200 = vpop.xlane.xlu0 %199
      %v201 = vsel %vm191, %v185, 0.0
      %202 = vadd.xlane.f32.xlu0 %v201
      %v203 = vpop.xlane.xlu0 %202
      %v204 = vsel %vm191, %v186, 0.0
      %205 = vadd.xlane.f32.xlu0 %v204
      %v206 = vpop.xlane.xlu0 %205
      %v207 = vsel %vm191, %v187, 0.0
      %208 = vadd.xlane.f32.xlu0 %v207
      %v209 = vpop.xlane.xlu0 %208
      %v210 = vsel %vm191, %v188, 0.0
      %211 = vadd.xlane.f32.xlu0 %v210
      %v212 = vpop.xlane.xlu0 %211
      %v213 = vsel %vm191, %v189, 0.0
      %214 = vadd.xlane.f32.xlu0 %v213
      %v215 = vpop.xlane.xlu0 %214
      %vm216 = vcmask 78848
      %v217 = vsel %vm216, %v190, 0.0
      %218 = vadd.xlane.f32.xlu0 %v217
      %v219 = vpop.xlane.xlu0 %218
      %v220 = vsel %vm191, %v126, -inf
      %221 = vmax.xlane.f32.xlu0 %v220
      %v222 = vpop.xlane.xlu0 %221
      %v223 = vsel %vm191, %v127, -inf
      %224 = vmax.xlane.f32.xlu0 %v223
      %v225 = vpop.xlane.xlu0 %224
      %v226 = vsel %vm191, %v128, -inf
      %227 = vmax.xlane.f32.xlu0 %v226
      %v228 = vpop.xlane.xlu0 %227
      %v229 = vsel %vm191, %v129, -inf
      %230 = vmax.xlane.f32.xlu0 %v229
      %v231 = vpop.xlane.xlu0 %230
      %v232 = vsel %vm191, %v130, -inf
      %233 = vmax.xlane.f32.xlu0 %v232
      %v234 = vpop.xlane.xlu0 %233
      %v235 = vsel %vm191, %v131, -inf
      %236 = vmax.xlane.f32.xlu0 %v235
      %v237 = vpop.xlane.xlu0 %236
      %v238 = vsel %vm191, %v132, -inf
      %239 = vmax.xlane.f32.xlu0 %v238
      %v240 = vpop.xlane.xlu0 %239
      %v241 = vsel %vm191, %v133, -inf
      %242 = vmax.xlane.f32.xlu0 %v241
      %v243 = vpop.xlane.xlu0 %242
      %v244 = vsel %vm216, %v134, -inf
      %245 = vmax.xlane.f32.xlu0 %v244
      %v246 = vpop.xlane.xlu0 %245
      %v247 = vsub.f32 %v126, %v222
      %v248 = vsub.f32 %v127, %v225
      %v249 = vsub.f32 %v128, %v228
      %v250 = vsub.f32 %v129, %v231
      %v251 = vsub.f32 %v130, %v234
      %v252 = vsub.f32 %v131, %v237
      %v253 = vsub.f32 %v132, %v240
      %v254 = vsub.f32 %v133, %v243
      %v255 = vsub.f32 %v134, %v246
      %v256 = vmul.f32 %v247, 1.442695
      %v257 = vpow.pop %v256
      %v258 = vmul.f32 %v248, 1.442695
      %v259 = vpow.pop %v258
      %v260 = vmul.f32 %v249, 1.442695
      %v261 = vpow.pop %v260
      %v262 = vmul.f32 %v250, 1.442695
      %v263 = vpow.pop %v262
      %v264 = vmul.f32 %v251, 1.442695
      %v265 = vpow.pop %v264
      %v266 = vmul.f32 %v252, 1.442695
      %v267 = vpow.pop %v266
      %v268 = vmul.f32 %v253, 1.442695
      %v269 = vpow.pop %v268
      %v270 = vmul.f32 %v254, 1.442695
      %v271 = vpow.pop %v270
      %v272 = vmul.f32 %v255, 1.442695
      %v273 = vpow.pop %v272
      %v274 = vsel %vm191, %v257, 0.0
      %275 = vadd.xlane.f32.xlu0 %v274
      %v276 = vpop.xlane.xlu0 %275
      %v277 = vsel %vm191, %v259, 0.0
      %278 = vadd.xlane.f32.xlu0 %v277
      %v279 = vpop.xlane.xlu0 %278
      %v280 = vsel %vm191, %v261, 0.0
      %281 = vadd.xlane.f32.xlu0 %v280
      %v282 = vpop.xlane.xlu0 %281
      %v283 = vsel %vm191, %v263, 0.0
      %284 = vadd.xlane.f32.xlu0 %v283
      %v285 = vpop.xlane.xlu0 %284
      %v286 = vsel %vm191, %v265, 0.0
      %287 = vadd.xlane.f32.xlu0 %v286
      %v288 = vpop.xlane.xlu0 %287
      %v289 = vsel %vm191, %v267, 0.0
      %290 = vadd.xlane.f32.xlu0 %v289
      %v291 = vpop.xlane.xlu0 %290
      %v292 = vsel %vm191, %v269, 0.0
      %293 = vadd.xlane.f32.xlu0 %v292
      %v294 = vpop.xlane.xlu0 %293
      %v295 = vsel %vm191, %v271, 0.0
      %296 = vadd.xlane.f32.xlu0 %v295
      %v297 = vpop.xlane.xlu0 %296
      %v298 = vsel %vm216, %v273, 0.0
      %299 = vadd.xlane.f32.xlu0 %v298
      %v300 = vpop.xlane.xlu0 %299
      %v301 = vlog2.pop %v276
      %v302 = vmul.f32 %v301, 0.6931472
      %v303 = vlog2.pop %v279
      %v304 = vmul.f32 %v303, 0.6931472
      %v305 = vlog2.pop %v282
      %v306 = vmul.f32 %v305, 0.6931472
      %v307 = vlog2.pop %v285
      %v308 = vmul.f32 %v307, 0.6931472
      %v309 = vlog2.pop %v288
      %v310 = vmul.f32 %v309, 0.6931472
      %v311 = vlog2.pop %v291
      %v312 = vmul.f32 %v311, 0.6931472
      %v313 = vlog2.pop %v294
      %v314 = vmul.f32 %v313, 0.6931472
      %v315 = vlog2.pop %v297
      %v316 = vmul.f32 %v315, 0.6931472
      %v317 = vlog2.pop %v300
      %v318 = vmul.f32 %v317, 0.6931472
      %v319 = vadd.f32 %v222, %v302
      %v320 = vadd.f32 %v225, %v304
      %v321 = vadd.f32 %v228, %v306
      %v322 = vadd.f32 %v231, %v308
      %v323 = vadd.f32 %v234, %v310
      %v324 = vadd.f32 %v237, %v312
      %v325 = vadd.f32 %v240, %v314
      %v326 = vadd.f32 %v243, %v316
      %v327 = vadd.f32 %v246, %v318
      %v328 = vsub.f32 %v319, %v194
      %v329 = vsub.f32 %v320, %v197
      %v330 = vsub.f32 %v321, %v200
      %v331 = vsub.f32 %v322, %v203
      %v332 = vsub.f32 %v323, %v206
      %v333 = vsub.f32 %v324, %v209
      %v334 = vsub.f32 %v325, %v212
      %v335 = vsub.f32 %v326, %v215
      %v336 = vsub.f32 %v327, %v219
      %v337 = vld [vmem:[#allocation2] sm:$0x1]
      %vm338 = vcmask 7168
      %v339 = vsel %vm338, %v328, 0.0
      %v340 = vsel %vm338, %v329, 0.0
      %v341 = vadd.f32 %v339, %v340
      %v342 = vsel %vm338, %v330, 0.0
      %v343 = vadd.f32 %v341, %v342
      %v344 = vsel %vm338, %v331, 0.0
      %v345 = vadd.f32 %v343, %v344
      %v346 = vsel %vm338, %v332, 0.0
      %v347 = vadd.f32 %v345, %v346
      %v348 = vsel %vm338, %v333, 0.0
      %v349 = vadd.f32 %v347, %v348
      %v350 = vsel %vm338, %v334, 0.0
      %v351 = vadd.f32 %v349, %v350
      %v352 = vsel %vm338, %v335, 0.0
      %v353 = vadd.f32 %v351, %v352
      %vm354 = vcmask 5120
      %v355 = vsel %vm354, %v336, 0.0
      %v356 = vadd.f32 %v353, %v355
      %357 = vadd.xlane.f32.xlu0 %v356
      %v358 = vpop.xlane.xlu0 %357
      %v359 = vrot.slane %v358, 4
      %v360 = vadd.f32 %v358, %v359
      %v361 = vrot.slane %v360, 2
      %v362 = vadd.f32 %v360, %v361
      %v363 = vrot.slane %v362, 1
      %v364 = vadd.f32 %v362, %v363
      %s365 = vtos %v364
      %v366 = vstv %s365
      %v367 = vadd.f32 %v337, %v366
      %vm368 = vcmask 0
      %369 = vst.msk [vmem:[#allocation2] sm:$0x1] %vm368, %v367
    $region25: #{tpu_custom_call.1} parent=1 // pred_fallthru
      _
    // Predicated region
    $region26: #{tpu_custom_call.1} parent=1 // pred_check
      _
    $region27: #{tpu_custom_call.1} parent=1 // pred_check_branch
      %371 = sbr.rel (0) target = $region29
    $region28: #{tpu_custom_call.1} parent=1 // pred_region
      %s373 = ssub.s32 16, 16
      %374 = vsyncadd [#allocation3], %s373
      %s376 = sshll.u32 [#allocation2], 4
      %s377 = int_to_ptr.vmem [resolvable:$true] %s376
      %379 = dma.vmem_to_hbm [thread:$0]  %s377, 16, %s4, [#allocation3]
    $region29: #{tpu_custom_call.1} parent=1 // pred_fallthru
      _
    // Predicated region
    $region30: #{tpu_custom_call.1} parent=1 // pred_check
      _
    $region31: #{tpu_custom_call.1} parent=1 // pred_check_branch
      %381 = sbr.rel (0) target = $region33
    $region32: #{tpu_custom_call.1} parent=1 // pred_region
      %382 = dma.done [#allocation3], 16
    $region33: #{tpu_custom_call.1} parent=1 // pred_fallthru
      _
    %383 = vsyncpa [#allocation3], 1

</llo_original>
